<compile_context>
chip_gen: v7x
topology: tpu7x:2x2x1
jax: 0.10.0
libtpu: 0.0.40
codegen_flags: <defaults>
</compile_context>

<pallas_src>
import numpy as np
import jax
import jax.numpy as jnp
from jax.experimental import pallas as pl
from jax.experimental.pallas import tpu as pltpu


# ----------------------------------------------------------------------------
# Helpers
# ----------------------------------------------------------------------------
def _round_up(x, m):
    return (x + m - 1) // m * m


def _season_indexes_over_seq(num_seasons, len_per_season, seq_len):
    # Mirrors SeasonalLayer._get_season_indexes_over_seq
    idx = np.repeat(np.arange(num_seasons), len_per_season)      # [0..0,1..1,...]
    reps = seq_len // len_per_season + 1
    return np.tile(idx, reps)[:seq_len]


def _choose_tn(d_pad, tn_target=2048):
    """Largest multiple of 128 dividing d_pad, <= tn_target, preferring >=2
    column tiles (keeps both v7x TensorCores busy when d_pad allows it)."""
    cap = tn_target
    if d_pad >= 256:
        cap = min(cap, (d_pad // 2) // 128 * 128)
    cap = max(128, min(cap, d_pad))
    t = cap // 128 * 128
    while t > 128:
        if d_pad % t == 0:
            return t
        t -= 128
    return 128


def _choose_tm(N, tm_target=256):
    """Batch tile + padded batch size.  Single sublane-aligned tile when the
    batch is small; otherwise bound padding waste to ~12.5%."""
    m8 = _round_up(N, 8)
    if m8 <= 512:
        return m8, m8
    for t in (tm_target, 128, 64, 32, 16, 8):
        mp = _round_up(N, t)
        if mp - m8 <= m8 // 8:
            return t, mp
    return 8, m8


# ----------------------------------------------------------------------------
# Parameter folding (plain JAX, runs ONCE per parameter set)
# ----------------------------------------------------------------------------
def fold_params(weights, biases, custom_seas, seq_len, feat_dim,
                param_dtype=jnp.bfloat16, tn_target=2048):
    """Fold per-spec Linear weights + season gather + sum-over-specs into one
    affine map with the bias appended as the last contraction row:
        out_flat[n, t*feat_dim + f] = ([z | 1] @ W_aug)[n, t*feat_dim + f]

    weights[i]: (feat_dim*ns_i, latent_dim), biases[i]: (feat_dim*ns_i,)
    Returns (W_aug (latent_dim+1, d_pad) in param_dtype, d_pad, tn).
    Column padding is done here so the forward path never re-pads parameters.
    """
    latent_dim = weights[0].shape[1]
    D = seq_len * feat_dim
    w_eff = jnp.zeros((latent_dim, D), jnp.float32)
    b_eff = jnp.zeros((D,), jnp.float32)
    for (ns, lps), w, b in zip(custom_seas, weights, biases):
        idx = jnp.asarray(_season_indexes_over_seq(ns, lps, seq_len))
        # w.T reshaped as (latent, feat_dim, ns): wt[l, f, s] = w[f*ns + s, l]
        wt = jnp.asarray(w, jnp.float32).T.reshape(latent_dim, feat_dim, ns)
        wg = jnp.transpose(wt[:, :, idx], (0, 2, 1))      # (latent, seq, feat)
        w_eff = w_eff + wg.reshape(latent_dim, D)
        bg = jnp.asarray(b, jnp.float32).reshape(feat_dim, ns)[:, idx].T
        b_eff = b_eff + bg.reshape(D)

    w_aug = jnp.concatenate([w_eff, b_eff[None, :]], axis=0)   # (latent+1, D)

    d_pad = _round_up(D, 128)
    if d_pad != D:
        w_aug = jnp.zeros((latent_dim + 1, d_pad), jnp.float32).at[:, :D].set(w_aug)
    w_aug = w_aug.astype(param_dtype)

    tn = _choose_tn(d_pad, tn_target)
    return w_aug, d_pad, tn


# ----------------------------------------------------------------------------
# Pallas kernel: one (tm, tn) tile of the fused affine map
# ----------------------------------------------------------------------------
def _seasonal_kernel(z_ref, w_ref, o_ref):
    o_ref[...] = jnp.dot(z_ref[...], w_ref[...],
                         preferred_element_type=jnp.float32)


def seasonal_forward(z, w_aug, seq_len, feat_dim, d_pad, tn, force_pallas=False):
    """z: (N, latent_dim); w_aug/d_pad/tn from fold_params.
    Returns (N, seq_len, feat_dim) f32 (matching the PyTorch module output)."""
    N, latent = z.shape
    K = latent + 1
    D = seq_len * feat_dim
    assert w_aug.shape == (K, d_pad)

    z_aug = jnp.concatenate(
        [z.astype(w_aug.dtype), jnp.ones((N, 1), w_aug.dtype)], axis=1)  # (N, K)

    # Tiny problems: pallas_call launch + per-step overhead dwarfs the work.
    if not force_pallas and N * K * d_pad < (1 << 18):
        out = jnp.dot(z_aug, w_aug, preferred_element_type=jnp.float32)
        return out[:, :D].reshape(N, seq_len, feat_dim)

    tm, m_pad = _choose_tm(N)
    if m_pad != N:
        z_aug = jnp.zeros((m_pad, K), w_aug.dtype).at[:N].set(z_aug)

    # Batch axis innermost: the W_aug block index is constant across the inner
    # loop, so each W column tile is DMA'd once; the tiny z tile is re-read.
    grid = (d_pad // tn, m_pad // tm)

    zb = z_aug.dtype.itemsize
    wb = w_aug.dtype.itemsize
    footprint = 2 * (tm * K * zb + K * tn * wb + tm * tn * 4)   # double-buffered
    vmem_limit = int(min(64 << 20, max(32 << 20, 2 * footprint)))

    out = pl.pallas_call(
        _seasonal_kernel,
        out_shape=jax.ShapeDtypeStruct((m_pad, d_pad), jnp.float32),
        grid_spec=pltpu.PrefetchScalarGridSpec(
            num_scalar_prefetch=0,
            grid=grid,
            in_specs=[
                pl.BlockSpec((tm, K), lambda j, i: (i, 0)),    # z tile
                pl.BlockSpec((K, tn), lambda j, i: (0, j)),    # W_aug tile
            ],
            out_specs=pl.BlockSpec((tm, tn), lambda j, i: (i, j)),
        ),
        compiler_params=pltpu.CompilerParams(
            dimension_semantics=("parallel", "parallel"),
            vmem_limit_bytes=vmem_limit,
        ),
        cost_estimate=pl.CostEstimate(
            flops=2 * m_pad * K * d_pad,
            transcendentals=0,
            bytes_accessed=(m_pad * K * zb * (d_pad // tn)   # z re-read per col tile
                            + K * d_pad * wb                 # W streamed once
                            + m_pad * d_pad * 4),            # output write
        ),
    )(z_aug, w_aug)

    return out[:N, :D].reshape(N, seq_len, feat_dim)


# ----------------------------------------------------------------------------
# Pure-JAX reference mirroring the PyTorch forward (gather + sum + permute)
# ----------------------------------------------------------------------------
def seasonal_reference(z, weights, biases, custom_seas, seq_len, feat_dim):
    N = z.shape[0]
    total = jnp.zeros((N, feat_dim, seq_len), jnp.float32)
    for (ns, lps), w, b in zip(custom_seas, weights, biases):
        p = (z @ w.T + b).reshape(N, feat_dim, ns)
        idx = jnp.asarray(_season_indexes_over_seq(ns, lps, seq_len))
        total = total + jnp.take(p, idx, axis=2)          # (N, feat_dim, seq_len)
    return jnp.transpose(total, (0, 2, 1))                # (N, seq_len, feat_dim)


if __name__ == "__main__":
    # Small, module-consistent shapes.
    N = 2
    latent_dim = 32
    feat_dim = 4
    seq_len = 8
    custom_seas = [(2, 4), (4, 2)]   # (num_seasons, len_per_season)

    key = jax.random.PRNGKey(0)
    keys = jax.random.split(key, 1 + 2 * len(custom_seas))

    z = jax.random.normal(keys[0], (N, latent_dim), dtype=jnp.float32)

    weights, biases = [], []
    for i, (ns, _) in enumerate(custom_seas):
        kw, kb = keys[1 + 2 * i], keys[2 + 2 * i]
        bound = 1.0 / np.sqrt(latent_dim)   # nn.Linear default init range
        weights.append(jax.random.uniform(kw, (feat_dim * ns, latent_dim),
                                          minval=-bound, maxval=bound,
                                          dtype=jnp.float32))
        biases.append(jax.random.uniform(kb, (feat_dim * ns,),
                                         minval=-bound, maxval=bound,
                                         dtype=jnp.float32))

    # Fold once per parameter set (Linear_i + gather + sum + bias -> one matmul).
    w_aug, d_pad, tn = fold_params(weights, biases, custom_seas,
                                   seq_len, feat_dim, param_dtype=jnp.bfloat16)

    out = seasonal_forward(z, w_aug, seq_len, feat_dim, d_pad, tn,
                           force_pallas=True)   # force Pallas path at demo size
    out = jax.block_until_ready(out)
    assert out.shape == (N, seq_len, feat_dim)

    # Tight check against the same bf16-folded affine map (isolates kernel math).
    z_aug_ref = jnp.concatenate(
        [z.astype(jnp.bfloat16), jnp.ones((N, 1), jnp.bfloat16)],
        axis=1).astype(jnp.float32)
    tight_ref = (z_aug_ref @ w_aug.astype(jnp.float32))[:, :seq_len * feat_dim]
    tight_ref = tight_ref.reshape(N, seq_len, feat_dim)
    np.testing.assert_allclose(np.asarray(out), np.asarray(tight_ref),
                               rtol=1e-4, atol=1e-4)

    # Loose check against the exact f32 PyTorch-mirroring path (bf16 rounding
    # of z / W_aug is the only difference).
    ref = seasonal_reference(z, weights, biases, custom_seas, seq_len, feat_dim)
    np.testing.assert_allclose(np.asarray(out), np.asarray(ref),
                               rtol=5e-2, atol=5e-2)

    print("KERNEL_OK")
</pallas_src>

<mosaic_0001>
module attributes {stable_mosaic.version = 11 : i64} {
  func.func @_seasonal_kernel(%arg0: i32, %arg1: i32, %arg2: memref<8x33xbf16, #tpu.memory_space<vmem>>, %arg3: memref<33x128xbf16, #tpu.memory_space<vmem>>, %arg4: memref<8x128xf32, #tpu.memory_space<vmem>>) attributes {dimension_semantics = [#tpu.dimension_semantics<parallel>, #tpu.dimension_semantics<parallel>], iteration_bounds = array<i64: 1, 1>, scalar_prefetch = 0 : i64, scratch_operands = 0 : i64, tpu.core_type = #tpu.core_type<tc>, window_params = [{transform_indices = @transform_0, window_bounds = array<i64: 8, 33>}, {transform_indices = @transform_1, window_bounds = array<i64: 33, 128>}, {transform_indices = @transform_2, window_bounds = array<i64: 8, 128>}]} {
    %c0 = arith.constant 0 : index
    %c0_0 = arith.constant 0 : index
    %0 = vector.load %arg2[%c0, %c0_0] : memref<8x33xbf16, #tpu.memory_space<vmem>>, vector<8x33xbf16>
    %c0_1 = arith.constant 0 : index
    %c0_2 = arith.constant 0 : index
    %1 = vector.load %arg3[%c0_1, %c0_2] : memref<33x128xbf16, #tpu.memory_space<vmem>>, vector<33x128xbf16>
    %cst = arith.constant dense<0.000000e+00> : vector<8x128xf32>
    %2 = tpu.matmul %0, %1, %cst {dimension_numbers = #tpu.dot_dimension_numbers<[1], [0], [0], [1], [0, 0, 1, 1], [], []>} : vector<8x33xbf16>, vector<33x128xbf16>, vector<8x128xf32> -> vector<8x128xf32>
    %c0_3 = arith.constant 0 : index
    %c0_4 = arith.constant 0 : index
    %3 = vector.load %arg4[%c0_3, %c0_4] : memref<8x128xf32, #tpu.memory_space<vmem>>, vector<8x128xf32>
    tpu.vector_store %arg4[%c0_3, %c0_4], %2 {strides = array<i32>} : memref<8x128xf32, #tpu.memory_space<vmem>>, vector<8x128xf32>,
    return
  }
  func.func @transform_0(%arg0: i32, %arg1: i32) -> (i32, i32) {
    %c0_i32 = arith.constant 0 : i32
    %c0_i32_0 = arith.constant 0 : i32
    return %arg1, %c0_i32 : i32, i32
  }
  func.func @transform_1(%arg0: i32, %arg1: i32) -> (i32, i32) {
    %c0_i32 = arith.constant 0 : i32
    %c0_i32_0 = arith.constant 0 : i32
    return %c0_i32, %arg0 : i32, i32
  }
  func.func @transform_2(%arg0: i32, %arg1: i32) -> (i32, i32) {
    %c0_i32 = arith.constant 0 : i32
    return %arg1, %arg0 : i32, i32
  }
}

</mosaic_0001>

<llo_original>
// kernel: tpu_custom_call.1
$region0: #{tpu_custom_call.1}
  #allocation0 [shape = 'u32[]', space=smem, size = 0x4, offset = 0x4, fixed_abs, tag = 'smem constant byte address 0x4 - core index']
  #allocation1 [shape = 'u32[144,128]{1,0:T(1,128)}', space=vmem, size = 0x12000, scoped, tag = 'internal scratch']
  %s0 = inlined_call_operand.hbm [shape: bf16[8,33], index: 0, kind: input, shape index: {}]
  %s1 = inlined_call_operand.hbm [shape: bf16[33,128], index: 1, kind: input, shape index: {}]
  %s2 = inlined_call_operand.hbm [shape: f32[8,128], index: 2, kind: output, shape index: {}]
  %s3 = sld [smem:[#allocation0]]
  $region26: #{tpu_custom_call.1} parent=0
    _
  %s5 = ssub.s32 1, %s3
  %s6 = scalar_select 0, %s5, %s3
  $region1: #{tpu_custom_call.1} parent=0
    #allocation2 [shape = 'u8[2048]{0}', space=vmem, size = 0x800, scoped, tag = 'input window, operand 0, single buffered']
    #allocation3 [shape = 's32[1]{0}', space=sflag, size = 0x4, scoped, tag = 'scoped memory for tpu_custom_call.1']
    #allocation4 [shape = 's32[1]{0}', space=sflag, size = 0x4, scoped, tag = 'scoped memory for tpu_custom_call.1']
    #allocation5 [shape = 'u8[10240]{0}', space=vmem, size = 0x2800, scoped, tag = 'input window, operand 1, single buffered']
    #allocation6 [shape = 's32[1]{0}', space=sflag, size = 0x4, scoped, tag = 'scoped memory for tpu_custom_call.1']
    #allocation7 [shape = 'u8[4096]{0}', space=vmem, size = 0x1000, scoped, tag = 'output window, operand 0, single buffered']
    %7 = vsyncpa [#allocation3], 0
    %8 = vsyncpa [#allocation6], 0
    %9 = vsyncpa [#allocation4], 0
    // Predicated region
    $region2: #{tpu_custom_call.1} parent=1 // pred_check
      _
    $region3: #{tpu_custom_call.1} parent=1 // pred_check_branch
      %11 = sbr.rel (0) target = $region5
    $region4: #{tpu_custom_call.1} parent=1 // pred_region
      %s13 = ssub.s32 64, 64
      %14 = vsyncadd [#allocation3], %s13
      %s16 = sshll.u32 [#allocation2], 4
      %s17 = int_to_ptr.vmem [resolvable:$true] %s16
      %19 = dma.hbm_to_vmem [thread:$0]  %s0, 64, %s17, [#allocation3]
    $region5: #{tpu_custom_call.1} parent=1 // pred_fallthru
      _
    // Predicated region
    $region6: #{tpu_custom_call.1} parent=1 // pred_check
      _
    $region7: #{tpu_custom_call.1} parent=1 // pred_check_branch
      %21 = sbr.rel (0) target = $region9
    $region8: #{tpu_custom_call.1} parent=1 // pred_region
      %s23 = ssub.s32 320, 320
      %24 = vsyncadd [#allocation6], %s23
      %s25 = sshll.u32 [#allocation5], 4
      %s26 = int_to_ptr.vmem [resolvable:$true] %s25
      %31 = dma.hbm_to_vmem [thread:$0]  %s1, 320, %s26, [#allocation6], 64, 64, 4
    $region9: #{tpu_custom_call.1} parent=1 // pred_fallthru
      _
    // Predicated region
    $region10: #{tpu_custom_call.1} parent=1 // pred_check
      _
    $region11: #{tpu_custom_call.1} parent=1 // pred_check_branch
      %33 = sbr.rel (0) target = $region13
    $region12: #{tpu_custom_call.1} parent=1 // pred_region
      %34 = dma.done [#allocation3], 64
    $region13: #{tpu_custom_call.1} parent=1 // pred_fallthru
      _
    // Predicated region
    $region14: #{tpu_custom_call.1} parent=1 // pred_check
      _
    $region15: #{tpu_custom_call.1} parent=1 // pred_check_branch
      %36 = sbr.rel (0) target = $region17
    $region16: #{tpu_custom_call.1} parent=1 // pred_region
      %37 = dma.done [#allocation6], 320
    $region17: #{tpu_custom_call.1} parent=1 // pred_fallthru
      _
    %v39 = vld [vmem:[#allocation2] sm:$0xf]
    %v40 = vld [vmem:[#allocation5] sm:$0xf]
    %v41 = vld [vmem:[#allocation5 + $0x4] sm:$0xf]
    %v42 = vld [vmem:[#allocation5 + $0x8] sm:$0xf]
    %v43 = vld [vmem:[#allocation5 + $0xc] sm:$0xf]
    %v44 = vld [vmem:[#allocation5 + $0x10] sm:$0x1]
    %v50 = vunpack.c.l.b16 %v40
    %v51 = vunpack.c.l.b16 %v41
    %v52 = vunpack.c.l.b16 %v42
    %v53 = vunpack.c.l.b16 %v43
    %v54 = vunpack.c.l.b16 %v44
    %v55 = vpack.c.b16 %v51, %v50
    %v56 = vpack.c.b16 %v53, %v52
    %v57 = vpack.c.b16 %v54, %v54
    %vm60 = vcmask 269312
    %v62 = vsel %vm60, %v39, 0
    %vm64 = vcmask 1040384
    %v65 = vsel 0, 4294967295, 65535
    %v66 = vsel %vm64, %v65, 0
    %v68 = vand.u32 %v57, %v66
    %70 = vmatprep.subr.bf16.mxu0 0
    %71 = vmatpush1.bf16.msra.mxu0 %v55
    %72 = vmatprep.subr.bf16.mxu0 0
    %73 = vmatpush1.bf16.msra.mxu0 %v56
    %74 = vmatprep.subr.bf16.mxu0 0
    %75 = vmatpush1.bf16.msra.mxu0 %v68
    %76 = vmatprep.subr.bf16.mxu0 0
    %77 = vmatpush1.bf16.msra.mxu0 0
    %78 = vmatprep.subr.bf16.mxu0 0
    %79 = vmatpush1.bf16.msra.mxu0 0
    %80 = vmatprep.subr.bf16.mxu0 0
    %81 = vmatpush1.bf16.msra.mxu0 0
    %82 = vmatprep.subr.bf16.mxu0 0
    %83 = vmatpush1.bf16.msra.mxu0 0
    %84 = vmatprep.subr.bf16.mxu0 0
    %85 = vmatpush1.bf16.msra.mxu0 0
    %86 = vmatprep.subr.bf16.mxu0 0
    %87 = vmatpush1.bf16.msra.mxu0 0
    %88 = vmatprep.subr.bf16.mxu0 0
    %89 = vmatpush1.bf16.msra.mxu0 0
    %90 = vmatprep.subr.bf16.mxu0 0
    %91 = vmatpush1.bf16.msra.mxu0 0
    %92 = vmatprep.subr.bf16.mxu0 0
    %93 = vmatpush1.bf16.msra.mxu0 0
    %94 = vmatprep.subr.bf16.mxu0 0
    %95 = vmatpush1.bf16.msra.mxu0 0
    %96 = vmatprep.subr.bf16.mxu0 0
    %97 = vmatpush1.bf16.msra.mxu0 0
    %98 = vmatprep.subr.bf16.mxu0 0
    %99 = vmatpush1.bf16.msra.mxu0 0
    %100 = vmatprep.subr.bf16.mxu0 0
    %101 = vmatpush1.bf16.msra.mxu0 0
    %102 = vmatprep.mubr.bf16.mxu0 0
    %103 = vmatmul.mubr.bf16.gmra.mrb[0].mxu0 %v62
    %v104 = vpop.f32.mrb[0].mxu0
    %v105 = vadd.f32 0.0, %v104
    %v106 = vpop.f32.mrb[0].mxu0
    %v107 = vpop.f32.mrb[0].mxu0
    %v108 = vpop.f32.mrb[0].mxu0
    %109 = vdwg.mxu0
    %110 = vst [vmem:[#allocation7] sm:$0xff] %v105
    // Predicated region
    $region18: #{tpu_custom_call.1} parent=1 // pred_check
      _
    $region19: #{tpu_custom_call.1} parent=1 // pred_check_branch
      %112 = sbr.rel (0) target = $region21
    $region20: #{tpu_custom_call.1} parent=1 // pred_region
      %s114 = ssub.s32 128, 128
      %115 = vsyncadd [#allocation4], %s114
      %s117 = sshll.u32 [#allocation7], 4
      %s118 = int_to_ptr.vmem [resolvable:$true] %s117
      %120 = dma.vmem_to_hbm [thread:$0]  %s118, 128, %s2, [#allocation4]
    $region21: #{tpu_custom_call.1} parent=1 // pred_fallthru
      _
    // Predicated region
    $region22: #{tpu_custom_call.1} parent=1 // pred_check
      _
    $region23: #{tpu_custom_call.1} parent=1 // pred_check_branch
      %122 = sbr.rel (0) target = $region25
    $region24: #{tpu_custom_call.1} parent=1 // pred_region
      %123 = dma.done [#allocation4], 128
    $region25: #{tpu_custom_call.1} parent=1 // pred_fallthru
      _
    %124 = vsyncpa [#allocation3], 1
    %125 = vsyncpa [#allocation6], 1
    %126 = vsyncpa [#allocation4], 1

</llo_original>
